<compile_context>
chip_gen: v7x
topology: tpu7x:2x2x1
jax: 0.10.0
libtpu: 0.0.40
codegen_flags: <defaults>
</compile_context>

<pallas_src>
import functools

import jax
import jax.numpy as jnp
from jax.experimental import pallas as pl
from jax.experimental.pallas import tpu as pltpu

LANE = 128
SUBLANE = 8


def _round_up(x, m):
    return (x + m - 1) // m * m


def actor_forward_kernel(n_act,
                         x_ref, w1_ref, b1_ref, w2_ref, b2_ref, wh_ref, bh_ref,
                         out_ref):
    # Matmul operands in bf16 (MXU-native), f32 accumulation, f32 epilogue.
    x = x_ref[...].astype(jnp.bfloat16)

    # fc1 + ReLU  (padded hidden lanes stay exactly 0: zero weights/bias -> relu(0)=0)
    h1 = jnp.dot(x, w1_ref[...], preferred_element_type=jnp.float32) + b1_ref[...]
    h1 = jnp.maximum(h1, 0.0)

    # fc2 + ReLU
    h2 = jnp.dot(h1.astype(jnp.bfloat16), w2_ref[...],
                 preferred_element_type=jnp.float32) + b2_ref[...]
    h2 = jnp.maximum(h2, 0.0)

    # Fused head matmul: lanes [0, n_act) = mu, [n_act, 2*n_act) = sigma_raw.
    head = jnp.dot(h2.astype(jnp.bfloat16), wh_ref[...],
                   preferred_element_type=jnp.float32) + bh_ref[...]

    # clamp(-20, 2) + exp only on the sigma lanes (single compare lane mask).
    lane = jax.lax.broadcasted_iota(jnp.int32, head.shape, 1)
    sigma = jnp.exp(jnp.clip(head, -20.0, 2.0))
    out_ref[...] = jnp.where(lane >= n_act, sigma, head)


def pack_params(params):
    """Fuse the mu/sigma heads, pad hidden feature axes to 128 lanes, cast the
    matmul weights to bf16.  Call ONCE (after init / each optimizer step),
    not per forward call."""
    w1, b1 = params["w1"], params["b1"]
    w2, b2 = params["w2"], params["b2"]
    wmu, bmu = params["wmu"], params["bmu"]
    wsg, bsg = params["wsg"], params["bsg"]

    d_in, f1 = w1.shape
    f2 = w2.shape[1]
    n_act = wmu.shape[1]

    f1_p = _round_up(f1, LANE)
    f2_p = _round_up(f2, LANE)

    def pad2(a, rows, cols):
        return jnp.pad(a, ((0, rows - a.shape[0]), (0, cols - a.shape[1])))

    wh = jnp.concatenate([wmu, wsg], axis=1)   # (f2, 2*n_act)
    bh = jnp.concatenate([bmu, bsg], axis=1)   # (1,  2*n_act)

    return dict(
        # w1 contraction axis stays unpadded (d_in); only its output axis is
        # padded -> the state never needs lane-padding in the wrapper.
        w1=pad2(w1, d_in, f1_p).astype(jnp.bfloat16), b1=pad2(b1, 1, f1_p),
        w2=pad2(w2, f1_p, f2_p).astype(jnp.bfloat16), b2=pad2(b2, 1, f2_p),
        wh=pad2(wh, f2_p, 2 * n_act).astype(jnp.bfloat16), bh=bh,
        n_actions=n_act, d_in=d_in, f1=f1, f2=f2,
    )


def _device_tiling_defaults():
    try:
        kind = jax.devices()[0].device_kind.lower()
    except Exception:  # pragma: no cover - defensive
        kind = ""
    if "v7" in kind or "7x" in kind:
        # v7x: 2 TensorCores, 64 MiB physical VMEM -> prefer >= 2 medium tiles
        # so the "parallel" batch axis actually shards across both TCs.
        return 2048, 2
    # v5e / v6e: single TC, 128 MiB VMEM -> one big tile amortizes the
    # ~0.35us per-grid-step pipeline overhead that dominates this tiny kernel.
    return 4096, 1


def actor_forward(state, packed, *, max_tile_b=None, min_tiles=None):
    """state: (B, input_dim) float.  Returns (mu, sigma), each (B, n_actions)."""
    B, d_in = state.shape
    if d_in != packed["d_in"]:
        raise ValueError(
            f"state feature dim {d_in} != packed input dim {packed['d_in']}")

    n_act = packed["n_actions"]
    f1, f2 = packed["f1"], packed["f2"]
    f1_p = packed["w1"].shape[1]
    f2_p = packed["w2"].shape[1]
    head = 2 * n_act

    dflt_tile, dflt_min = _device_tiling_defaults()
    max_tile_b = dflt_tile if max_tile_b is None else max_tile_b
    min_tiles = dflt_min if min_tiles is None else min_tiles

    # Even tiles: b_pad stays within one sublane-group per tile of B (no blow-up
    # to the next tile multiple for awkward batch sizes, e.g. 520 with cap 512).
    n_tiles = max(min_tiles if B >= 2 * SUBLANE else 1, pl.cdiv(B, max_tile_b))
    tile_b = _round_up(pl.cdiv(B, n_tiles), SUBLANE)
    b_pad = n_tiles * tile_b

    x = state.astype(jnp.float32)
    if b_pad != B:
        x = jnp.pad(x, ((0, b_pad - B), (0, 0)))   # sublane-only padding, no lane pad

    kernel = functools.partial(actor_forward_kernel, n_act)
    resident = lambda i: (0, 0)   # weights/biases stay VMEM-resident across grid steps

    # Cost estimate from the TRUE (unpadded) dims.
    flops = 2 * B * (d_in * f1 + f1 * f2 + f2 * head)
    bytes_accessed = (4 * B * d_in + 4 * B * head                # f32 state in / out
                      + 2 * (d_in * f1 + f1 * f2 + f2 * head)    # bf16 weights
                      + 4 * (f1 + f2 + head))                    # f32 biases

    out = pl.pallas_call(
        kernel,
        out_shape=jax.ShapeDtypeStruct((b_pad, head), jnp.float32),
        grid=(n_tiles,),
        in_specs=[
            pl.BlockSpec((tile_b, d_in), lambda i: (i, 0)),   # state tile (no lane pad)
            pl.BlockSpec((d_in, f1_p), resident),             # w1 (bf16)
            pl.BlockSpec((1, f1_p), resident),                # b1 (f32)
            pl.BlockSpec((f1_p, f2_p), resident),             # w2 (bf16)
            pl.BlockSpec((1, f2_p), resident),                # b2 (f32)
            pl.BlockSpec((f2_p, head), resident),             # fused head weight (bf16)
            pl.BlockSpec((1, head), resident),                # fused head bias (f32)
        ],
        out_specs=pl.BlockSpec((tile_b, head), lambda i: (i, 0)),
        compiler_params=pltpu.CompilerParams(
            dimension_semantics=("parallel",)),                # v7x: both TCs
        cost_estimate=pl.CostEstimate(
            flops=flops,
            transcendentals=B * head,
            bytes_accessed=bytes_accessed),
    )(x, packed["w1"], packed["b1"], packed["w2"], packed["b2"],
      packed["wh"], packed["bh"])

    mu = out[:B, :n_act]
    sigma = out[:B, n_act:head]
    return mu, sigma


def init_actor_params(key, input_dim, fc1_dims, fc2_dims, n_actions):
    """PyTorch-Linear-style init: U(-1/sqrt(fan_in), 1/sqrt(fan_in)).
    Weights stored as (in, out) so the kernel computes x @ W."""
    def linear(k, fan_in, fan_out):
        kw, kb = jax.random.split(k)
        bound = 1.0 / jnp.sqrt(jnp.float32(fan_in))
        w = jax.random.uniform(kw, (fan_in, fan_out), jnp.float32, -bound, bound)
        b = jax.random.uniform(kb, (1, fan_out), jnp.float32, -bound, bound)
        return w, b

    k1, k2, k3, k4 = jax.random.split(key, 4)
    w1, b1 = linear(k1, input_dim, fc1_dims)
    w2, b2 = linear(k2, fc1_dims, fc2_dims)
    wmu, bmu = linear(k3, fc2_dims, n_actions)
    wsg, bsg = linear(k4, fc2_dims, n_actions)
    return dict(w1=w1, b1=b1, w2=w2, b2=b2, wmu=wmu, bmu=bmu, wsg=wsg, bsg=bsg)


def actor_forward_ref(state, p):
    """Plain-JAX f32 reference (mirrors the PyTorch forward) for verification."""
    h1 = jnp.maximum(state @ p["w1"] + p["b1"], 0.0)
    h2 = jnp.maximum(h1 @ p["w2"] + p["b2"], 0.0)
    mu = h2 @ p["wmu"] + p["bmu"]
    sigma = jnp.exp(jnp.clip(h2 @ p["wsg"] + p["bsg"], -20.0, 2.0))
    return mu, sigma


# TODO(synk): Adam optimizer state, parameter freezing, and Normal rsample /
# tanh-squashed log-prob (sample_normal*) are host/JAX-level concerns outside
# the forward-pass kernel; for very small batches (B < ~64) a plain fused-XLA
# forward avoids the fixed pallas_call overhead and can be dispatched by the caller.

if __name__ == "__main__":
    # Small shapes consistent with the module: input_dims=(16,), hidden=32, n_actions=8.
    batch = 2
    input_dim = 16
    fc1_dims = 32
    fc2_dims = 32
    n_actions = 8

    key = jax.random.PRNGKey(0)
    k_params, k_state, k_state2 = jax.random.split(key, 3)
    params = init_actor_params(k_params, input_dim, fc1_dims, fc2_dims, n_actions)
    packed = pack_params(params)          # pad/fuse/bf16-cast weights ONCE
    state = jax.random.normal(k_state, (batch, input_dim), jnp.float32)

    mu, sigma = actor_forward(state, packed)
    jax.block_until_ready((mu, sigma))

    mu_ref, sigma_ref = actor_forward_ref(state, params)
    assert mu.shape == (batch, n_actions) and sigma.shape == (batch, n_actions)
    # bf16 matmul operands -> relaxed tolerance vs. the f32 reference.
    assert jnp.allclose(mu, mu_ref, atol=3e-2, rtol=3e-2)
    assert jnp.allclose(sigma, sigma_ref, atol=3e-2, rtol=3e-2)
    assert bool(jnp.all(sigma > 0.0))

    # Second check: multi-tile path with an awkward batch size (exercises even
    # tiling, sublane-only padding and the "parallel" batch grid).
    batch2 = 260
    state2 = jax.random.normal(k_state2, (batch2, input_dim), jnp.float32)
    mu2, sigma2 = actor_forward(state2, packed, max_tile_b=128)
    jax.block_until_ready((mu2, sigma2))
    mu2_ref, sigma2_ref = actor_forward_ref(state2, params)
    assert mu2.shape == (batch2, n_actions)
    assert jnp.allclose(mu2, mu2_ref, atol=3e-2, rtol=3e-2)
    assert jnp.allclose(sigma2, sigma2_ref, atol=3e-2, rtol=3e-2)

    print("KERNEL_OK")
</pallas_src>

<mosaic_0001>
module attributes {stable_mosaic.version = 11 : i64} {
  func.func @actor_forward_kernel(%arg0: i32, %arg1: memref<8x16xf32, #tpu.memory_space<vmem>>, %arg2: memref<16x128xbf16, #tpu.memory_space<vmem>>, %arg3: memref<1x128xf32, #tpu.memory_space<vmem>>, %arg4: memref<128x128xbf16, #tpu.memory_space<vmem>>, %arg5: memref<1x128xf32, #tpu.memory_space<vmem>>, %arg6: memref<128x16xbf16, #tpu.memory_space<vmem>>, %arg7: memref<1x16xf32, #tpu.memory_space<vmem>>, %arg8: memref<8x16xf32, #tpu.memory_space<vmem>>) attributes {dimension_semantics = [#tpu.dimension_semantics<parallel>], iteration_bounds = array<i64: 1>, scalar_prefetch = 0 : i64, scratch_operands = 0 : i64, tpu.core_type = #tpu.core_type<tc>, window_params = [{transform_indices = @transform_0, window_bounds = array<i64: 8, 16>}, {pipeline_mode = #tpu.pipeline_mode<synchronous>, transform_indices = @transform_1, window_bounds = array<i64: 16, 128>}, {pipeline_mode = #tpu.pipeline_mode<synchronous>, transform_indices = @transform_2, window_bounds = array<i64: 1, 128>}, {pipeline_mode = #tpu.pipeline_mode<synchronous>, transform_indices = @transform_3, window_bounds = array<i64: 128, 128>}, {pipeline_mode = #tpu.pipeline_mode<synchronous>, transform_indices = @transform_4, window_bounds = array<i64: 1, 128>}, {pipeline_mode = #tpu.pipeline_mode<synchronous>, transform_indices = @transform_5, window_bounds = array<i64: 128, 16>}, {pipeline_mode = #tpu.pipeline_mode<synchronous>, transform_indices = @transform_6, window_bounds = array<i64: 1, 16>}, {transform_indices = @transform_7, window_bounds = array<i64: 8, 16>}]} {
    %c0 = arith.constant 0 : index
    %c0_0 = arith.constant 0 : index
    %0 = vector.load %arg1[%c0, %c0_0] : memref<8x16xf32, #tpu.memory_space<vmem>>, vector<8x16xf32>
    %1 = arith.truncf %0 : vector<8x16xf32> to vector<8x16xbf16>
    %c0_1 = arith.constant 0 : index
    %c0_2 = arith.constant 0 : index
    %2 = vector.load %arg2[%c0_1, %c0_2] : memref<16x128xbf16, #tpu.memory_space<vmem>>, vector<16x128xbf16>
    %cst = arith.constant dense<0.000000e+00> : vector<8x128xf32>
    %3 = tpu.matmul %1, %2, %cst {dimension_numbers = #tpu.dot_dimension_numbers<[1], [0], [0], [1], [0, 0, 1, 1], [], []>} : vector<8x16xbf16>, vector<16x128xbf16>, vector<8x128xf32> -> vector<8x128xf32>
    %c0_3 = arith.constant 0 : index
    %c0_4 = arith.constant 0 : index
    %4 = vector.load %arg3[%c0_3, %c0_4] : memref<1x128xf32, #tpu.memory_space<vmem>>, vector<1x128xf32>
    %5 = vector.broadcast %4 : vector<1x128xf32> to vector<8x128xf32>
    %6 = arith.addf %3, %5 : vector<8x128xf32>
    %cst_5 = arith.constant 0.000000e+00 : f32
    %7 = vector.broadcast %cst_5 : f32 to vector<8x128xf32>
    %8 = arith.maximumf %6, %7 : vector<8x128xf32>
    %9 = arith.truncf %8 : vector<8x128xf32> to vector<8x128xbf16>
    %c0_6 = arith.constant 0 : index
    %c0_7 = arith.constant 0 : index
    %10 = vector.load %arg4[%c0_6, %c0_7] : memref<128x128xbf16, #tpu.memory_space<vmem>>, vector<128x128xbf16>
    %cst_8 = arith.constant dense<0.000000e+00> : vector<8x128xf32>
    %11 = tpu.matmul %9, %10, %cst_8 {dimension_numbers = #tpu.dot_dimension_numbers<[1], [0], [0], [1], [0, 0, 1, 1], [], []>} : vector<8x128xbf16>, vector<128x128xbf16>, vector<8x128xf32> -> vector<8x128xf32>
    %c0_9 = arith.constant 0 : index
    %c0_10 = arith.constant 0 : index
    %12 = vector.load %arg5[%c0_9, %c0_10] : memref<1x128xf32, #tpu.memory_space<vmem>>, vector<1x128xf32>
    %13 = vector.broadcast %12 : vector<1x128xf32> to vector<8x128xf32>
    %14 = arith.addf %11, %13 : vector<8x128xf32>
    %cst_11 = arith.constant 0.000000e+00 : f32
    %15 = vector.broadcast %cst_11 : f32 to vector<8x128xf32>
    %16 = arith.maximumf %14, %15 : vector<8x128xf32>
    %17 = arith.truncf %16 : vector<8x128xf32> to vector<8x128xbf16>
    %c0_12 = arith.constant 0 : index
    %c0_13 = arith.constant 0 : index
    %18 = vector.load %arg6[%c0_12, %c0_13] : memref<128x16xbf16, #tpu.memory_space<vmem>>, vector<128x16xbf16>
    %cst_14 = arith.constant dense<0.000000e+00> : vector<8x16xf32>
    %19 = tpu.matmul %17, %18, %cst_14 {dimension_numbers = #tpu.dot_dimension_numbers<[1], [0], [0], [1], [0, 0, 1, 1], [], []>} : vector<8x128xbf16>, vector<128x16xbf16>, vector<8x16xf32> -> vector<8x16xf32>
    %c0_15 = arith.constant 0 : index
    %c0_16 = arith.constant 0 : index
    %20 = vector.load %arg7[%c0_15, %c0_16] : memref<1x16xf32, #tpu.memory_space<vmem>>, vector<1x16xf32>
    %21 = vector.broadcast %20 : vector<1x16xf32> to vector<8x16xf32>
    %22 = arith.addf %19, %21 : vector<8x16xf32>
    %23 = tpu.iota {dimensions = array<i32: 1>} : vector<8x16xi32>
    %cst_17 = arith.constant -2.000000e+01 : f32
    %cst_18 = arith.constant 2.000000e+00 : f32
    %24 = vector.broadcast %cst_17 : f32 to vector<8x16xf32>
    %25 = arith.maximumf %24, %22 : vector<8x16xf32>
    %26 = vector.broadcast %cst_18 : f32 to vector<8x16xf32>
    %27 = arith.minimumf %26, %25 : vector<8x16xf32>
    %28 = math.exp %27 : vector<8x16xf32>
    %c8_i32 = arith.constant 8 : i32
    %29 = vector.broadcast %c8_i32 : i32 to vector<8x16xi32>
    %30 = arith.cmpi sge, %23, %29 : vector<8x16xi32>
    %31 = arith.select %30, %28, %22 : vector<8x16xi1>, vector<8x16xf32>
    %c0_19 = arith.constant 0 : index
    %c0_20 = arith.constant 0 : index
    %32 = vector.load %arg8[%c0_19, %c0_20] : memref<8x16xf32, #tpu.memory_space<vmem>>, vector<8x16xf32>
    tpu.vector_store %arg8[%c0_19, %c0_20], %31 {strides = array<i32>} : memref<8x16xf32, #tpu.memory_space<vmem>>, vector<8x16xf32>,
    return
  }
  func.func @transform_0(%arg0: i32) -> (i32, i32) {
    %c0_i32 = arith.constant 0 : i32
    %c0_i32_0 = arith.constant 0 : i32
    return %arg0, %c0_i32 : i32, i32
  }
  func.func @transform_1(%arg0: i32) -> (i32, i32) {
    %c0_i32 = arith.constant 0 : i32
    %c0_i32_0 = arith.constant 0 : i32
    %c0_i32_1 = arith.constant 0 : i32
    return %c0_i32, %c0_i32_0 : i32, i32
  }
  func.func @transform_2(%arg0: i32) -> (i32, i32) {
    %c0_i32 = arith.constant 0 : i32
    %c0_i32_0 = arith.constant 0 : i32
    %c0_i32_1 = arith.constant 0 : i32
    return %c0_i32, %c0_i32_0 : i32, i32
  }
  func.func @transform_3(%arg0: i32) -> (i32, i32) {
    %c0_i32 = arith.constant 0 : i32
    %c0_i32_0 = arith.constant 0 : i32
    %c0_i32_1 = arith.constant 0 : i32
    return %c0_i32, %c0_i32_0 : i32, i32
  }
  func.func @transform_4(%arg0: i32) -> (i32, i32) {
    %c0_i32 = arith.constant 0 : i32
    %c0_i32_0 = arith.constant 0 : i32
    %c0_i32_1 = arith.constant 0 : i32
    return %c0_i32, %c0_i32_0 : i32, i32
  }
  func.func @transform_5(%arg0: i32) -> (i32, i32) {
    %c0_i32 = arith.constant 0 : i32
    %c0_i32_0 = arith.constant 0 : i32
    %c0_i32_1 = arith.constant 0 : i32
    return %c0_i32, %c0_i32_0 : i32, i32
  }
  func.func @transform_6(%arg0: i32) -> (i32, i32) {
    %c0_i32 = arith.constant 0 : i32
    %c0_i32_0 = arith.constant 0 : i32
    %c0_i32_1 = arith.constant 0 : i32
    return %c0_i32, %c0_i32_0 : i32, i32
  }
  func.func @transform_7(%arg0: i32) -> (i32, i32) {
    %c0_i32 = arith.constant 0 : i32
    %c0_i32_0 = arith.constant 0 : i32
    return %arg0, %c0_i32 : i32, i32
  }
}

</mosaic_0001>

<llo_original>
// kernel: tpu_custom_call.1
$region0: #{tpu_custom_call.1}
  #allocation0 [shape = 'u32[]', space=smem, size = 0x4, offset = 0x4, fixed_abs, tag = 'smem constant byte address 0x4 - core index']
  #allocation1 [shape = 'u32[144,128]{1,0:T(1,128)}', space=vmem, size = 0x12000, scoped, tag = 'internal scratch']
  %s0 = inlined_call_operand.vmem [shape: f32[8,16], index: 0, kind: input, shape index: {}]
  %s1 = inlined_call_operand.hbm [shape: bf16[16,128], index: 1, kind: input, shape index: {}]
  %s2 = inlined_call_operand.vmem [shape: f32[1,128], index: 2, kind: input, shape index: {}]
  %s3 = inlined_call_operand.vmem [shape: bf16[128,128], index: 3, kind: input, shape index: {}]
  %s4 = inlined_call_operand.vmem [shape: f32[1,128], index: 4, kind: input, shape index: {}]
  %s5 = inlined_call_operand.vmem [shape: bf16[128,16], index: 5, kind: input, shape index: {}]
  %s6 = inlined_call_operand.vmem [shape: f32[1,16], index: 6, kind: input, shape index: {}]
  %s7 = inlined_call_operand.hbm [shape: f32[8,16], index: 7, kind: output, shape index: {}]
  %s8 = sld [smem:[#allocation0]]
  $region42: #{tpu_custom_call.1} parent=0
    _
  %s10 = ssub.s32 1, %s8
  %s11 = scalar_select 0, %s10, %s8
  $region1: #{tpu_custom_call.1} parent=0
    #allocation2 [shape = 'u8[4096]{0}', space=vmem, size = 0x1000, scoped, tag = 'input window, operand 1, single buffered']
    #allocation3 [shape = 's32[1]{0}', space=sflag, size = 0x4, scoped, tag = 'scoped memory for tpu_custom_call.1']
    #allocation4 [shape = 's32[1]{0}', space=sflag, size = 0x4, scoped, tag = 'scoped memory for tpu_custom_call.1']
    #allocation5 [shape = 'u8[4096]{0}', space=vmem, size = 0x1000, scoped, tag = 'output window, operand 0, single buffered']
    %12 = vsyncpa [#allocation3], 0
    %13 = vsyncpa [#allocation4], 0
    // Predicated region
    $region2: #{tpu_custom_call.1} parent=1 // pred_check
      _
    $region3: #{tpu_custom_call.1} parent=1 // pred_check_branch
      %15 = sbr.rel (0) target = $region5
    $region4: #{tpu_custom_call.1} parent=1 // pred_region
      _
    $region5: #{tpu_custom_call.1} parent=1 // pred_fallthru
      _
    // Predicated region
    $region6: #{tpu_custom_call.1} parent=1 // pred_check
      _
    $region7: #{tpu_custom_call.1} parent=1 // pred_check_branch
      %17 = sbr.rel (0) target = $region9
    $region8: #{tpu_custom_call.1} parent=1 // pred_region
      %s19 = ssub.s32 128, 128
      %20 = vsyncadd [#allocation3], %s19
      %s21 = sshll.u32 [#allocation2], 4
      %s22 = int_to_ptr.vmem [resolvable:$true] %s21
      %27 = dma.hbm_to_vmem [thread:$0]  %s1, 128, %s22, [#allocation3], 64, 64, 4
    $region9: #{tpu_custom_call.1} parent=1 // pred_fallthru
      _
    // Predicated region
    $region10: #{tpu_custom_call.1} parent=1 // pred_check
      _
    $region11: #{tpu_custom_call.1} parent=1 // pred_check_branch
      %29 = sbr.rel (0) target = $region13
    $region12: #{tpu_custom_call.1} parent=1 // pred_region
      _
    $region13: #{tpu_custom_call.1} parent=1 // pred_fallthru
      _
    // Predicated region
    $region14: #{tpu_custom_call.1} parent=1 // pred_check
      _
    $region15: #{tpu_custom_call.1} parent=1 // pred_check_branch
      %31 = sbr.rel (0) target = $region17
    $region16: #{tpu_custom_call.1} parent=1 // pred_region
      _
    $region17: #{tpu_custom_call.1} parent=1 // pred_fallthru
      _
    // Predicated region
    $region18: #{tpu_custom_call.1} parent=1 // pred_check
      _
    $region19: #{tpu_custom_call.1} parent=1 // pred_check_branch
      %33 = sbr.rel (0) target = $region21
    $region20: #{tpu_custom_call.1} parent=1 // pred_region
      _
    $region21: #{tpu_custom_call.1} parent=1 // pred_fallthru
      _
    // Predicated region
    $region22: #{tpu_custom_call.1} parent=1 // pred_check
      _
    $region23: #{tpu_custom_call.1} parent=1 // pred_check_branch
      %35 = sbr.rel (0) target = $region25
    $region24: #{tpu_custom_call.1} parent=1 // pred_region
      _
    $region25: #{tpu_custom_call.1} parent=1 // pred_fallthru
      _
    // Predicated region
    $region26: #{tpu_custom_call.1} parent=1 // pred_check
      _
    $region27: #{tpu_custom_call.1} parent=1 // pred_check_branch
      %37 = sbr.rel (0) target = $region29
    $region28: #{tpu_custom_call.1} parent=1 // pred_region
      _
    $region29: #{tpu_custom_call.1} parent=1 // pred_fallthru
      _
    // Predicated region
    $region30: #{tpu_custom_call.1} parent=1 // pred_check
      _
    $region31: #{tpu_custom_call.1} parent=1 // pred_check_branch
      %39 = sbr.rel (0) target = $region33
    $region32: #{tpu_custom_call.1} parent=1 // pred_region
      %40 = dma.done [#allocation3], 128
    $region33: #{tpu_custom_call.1} parent=1 // pred_fallthru
      _
    %v42 = vld [vmem:[%s0] sm:$0xff]
    %v43 = vpack.c.bf16 %v42, %v42
    %v44 = vld [vmem:[#allocation2] sm:$0xf]
    %v45 = vld [vmem:[#allocation2 + $0x4] sm:$0xf]
    %v46 = vld [vmem:[%s2] sm:$0x1]
    %v48 = vlaneseq
    %v49 = vshrl.u32 %v48, 7
    %v50 = vsub.s32 0, %v49
    %v51 = vrot.slane %v46, %v50
    %v55 = vunpack.c.l.b16 %v44
    %v56 = vunpack.c.l.b16 %v45
    %v57 = vpack.c.b16 %v56, %v55
    %vm59 = vcmask 130048
    %v61 = vsel %vm59, %v43, 0
    %63 = vmatprep.subr.bf16.mxu0 0
    %64 = vmatpush1.bf16.msra.mxu0 %v57
    %65 = vmatprep.subr.bf16.mxu0 0
    %66 = vmatpush1.bf16.msra.mxu0 0
    %67 = vmatprep.subr.bf16.mxu0 0
    %68 = vmatpush1.bf16.msra.mxu0 0
    %69 = vmatprep.subr.bf16.mxu0 0
    %70 = vmatpush1.bf16.msra.mxu0 0
    %71 = vmatprep.subr.bf16.mxu0 0
    %72 = vmatpush1.bf16.msra.mxu0 0
    %73 = vmatprep.subr.bf16.mxu0 0
    %74 = vmatpush1.bf16.msra.mxu0 0
    %75 = vmatprep.subr.bf16.mxu0 0
    %76 = vmatpush1.bf16.msra.mxu0 0
    %77 = vmatprep.subr.bf16.mxu0 0
    %78 = vmatpush1.bf16.msra.mxu0 0
    %79 = vmatprep.subr.bf16.mxu0 0
    %80 = vmatpush1.bf16.msra.mxu0 0
    %81 = vmatprep.subr.bf16.mxu0 0
    %82 = vmatpush1.bf16.msra.mxu0 0
    %83 = vmatprep.subr.bf16.mxu0 0
    %84 = vmatpush1.bf16.msra.mxu0 0
    %85 = vmatprep.subr.bf16.mxu0 0
    %86 = vmatpush1.bf16.msra.mxu0 0
    %87 = vmatprep.subr.bf16.mxu0 0
    %88 = vmatpush1.bf16.msra.mxu0 0
    %89 = vmatprep.subr.bf16.mxu0 0
    %90 = vmatpush1.bf16.msra.mxu0 0
    %91 = vmatprep.subr.bf16.mxu0 0
    %92 = vmatpush1.bf16.msra.mxu0 0
    %93 = vmatprep.subr.bf16.mxu0 0
    %94 = vmatpush1.bf16.msra.mxu0 0
    %95 = vmatprep.mubr.bf16.mxu0 0
    %96 = vmatmul.mubr.bf16.gmra.mrb[0].mxu0 %v61
    %v97 = vpop.f32.mrb[0].mxu0
    %v98 = vadd.f32 %v51, %v97
    %v99 = vpop.f32.mrb[0].mxu0
    %v100 = vpop.f32.mrb[0].mxu0
    %v101 = vpop.f32.mrb[0].mxu0
    %102 = vdwg.mxu0
    %v103 = vmax.f32 %v98, 0.0
    %v104 = vpack.c.bf16 %v103, %v103
    %v105 = vld [vmem:[%s3] sm:$0xf]
    %v106 = vld [vmem:[%s3 + $0x4] sm:$0xf]
    %v107 = vld [vmem:[%s3 + $0x8] sm:$0xf]
    %v108 = vld [vmem:[%s3 + $0xc] sm:$0xf]
    %v109 = vld [vmem:[%s3 + $0x10] sm:$0xf]
    %v110 = vld [vmem:[%s3 + $0x14] sm:$0xf]
    %v111 = vld [vmem:[%s3 + $0x18] sm:$0xf]
    %v112 = vld [vmem:[%s3 + $0x1c] sm:$0xf]
    %v113 = vld [vmem:[%s3 + $0x20] sm:$0xf]
    %v114 = vld [vmem:[%s3 + $0x24] sm:$0xf]
    %v115 = vld [vmem:[%s3 + $0x28] sm:$0xf]
    %v116 = vld [vmem:[%s3 + $0x2c] sm:$0xf]
    %v117 = vld [vmem:[%s3 + $0x30] sm:$0xf]
    %v118 = vld [vmem:[%s3 + $0x34] sm:$0xf]
    %v119 = vld [vmem:[%s3 + $0x38] sm:$0xf]
    %v120 = vld [vmem:[%s3 + $0x3c] sm:$0xf]
    %v121 = vld [vmem:[%s4] sm:$0x1]
    %v123 = vlaneseq
    %v124 = vshrl.u32 %v123, 7
    %v125 = vsub.s32 0, %v124
    %v126 = vrot.slane %v121, %v125
    %v144 = vunpack.c.l.b16 %v105
    %v145 = vunpack.c.l.b16 %v106
    %v146 = vunpack.c.l.b16 %v107
    %v147 = vunpack.c.l.b16 %v108
    %v148 = vunpack.c.l.b16 %v109
    %v149 = vunpack.c.l.b16 %v110
    %v150 = vunpack.c.l.b16 %v111
    %v151 = vunpack.c.l.b16 %v112
    %v152 = vunpack.c.l.b16 %v113
    %v153 = vunpack.c.l.b16 %v114
    %v154 = vunpack.c.l.b16 %v115
    %v155 = vunpack.c.l.b16 %v116
    %v156 = vunpack.c.l.b16 %v117
    %v157 = vunpack.c.l.b16 %v118
    %v158 = vunpack.c.l.b16 %v119
    %v159 = vunpack.c.l.b16 %v120
    %v160 = vpack.c.b16 %v145, %v144
    %v161 = vpack.c.b16 %v147, %v146
    %v162 = vpack.c.b16 %v149, %v148
    %v163 = vpack.c.b16 %v151, %v150
    %v164 = vpack.c.b16 %v153, %v152
    %v165 = vpack.c.b16 %v155, %v154
    %v166 = vpack.c.b16 %v157, %v156
    %v167 = vpack.c.b16 %v159, %v158
    %176 = vmatprep.subr.bf16.mxu0 0
    %177 = vmatpush1.bf16.msra.mxu0 %v160
    %178 = vmatprep.subr.bf16.mxu0 0
    %179 = vmatpush1.bf16.msra.mxu0 %v161
    %180 = vmatprep.subr.bf16.mxu0 0
    %181 = vmatpush1.bf16.msra.mxu0 %v162
    %182 = vmatprep.subr.bf16.mxu0 0
    %183 = vmatpush1.bf16.msra.mxu0 %v163
    %184 = vmatprep.subr.bf16.mxu0 0
    %185 = vmatpush1.bf16.msra.mxu0 %v164
    %186 = vmatprep.subr.bf16.mxu0 0
    %187 = vmatpush1.bf16.msra.mxu0 %v165
    %188 = vmatprep.subr.bf16.mxu0 0
    %189 = vmatpush1.bf16.msra.mxu0 %v166
    %190 = vmatprep.subr.bf16.mxu0 0
    %191 = vmatpush1.bf16.msra.mxu0 %v167
    %192 = vmatprep.subr.bf16.mxu0 0
    %193 = vmatpush1.bf16.msra.mxu0 0
    %194 = vmatprep.subr.bf16.mxu0 0
    %195 = vmatpush1.bf16.msra.mxu0 0
    %196 = vmatprep.subr.bf16.mxu0 0
    %197 = vmatpush1.bf16.msra.mxu0 0
    %198 = vmatprep.subr.bf16.mxu0 0
    %199 = vmatpush1.bf16.msra.mxu0 0
    %200 = vmatprep.subr.bf16.mxu0 0
    %201 = vmatpush1.bf16.msra.mxu0 0
    %202 = vmatprep.subr.bf16.mxu0 0
    %203 = vmatpush1.bf16.msra.mxu0 0
    %204 = vmatprep.subr.bf16.mxu0 0
    %205 = vmatpush1.bf16.msra.mxu0 0
    %206 = vmatprep.subr.bf16.mxu0 0
    %207 = vmatpush1.bf16.msra.mxu0 0
    %208 = vmatprep.mubr.bf16.mxu0 0
    %209 = vmatmul.mubr.bf16.gmra.mrb[0].mxu0 %v104
    %v210 = vpop.f32.mrb[0].mxu0
    %v211 = vadd.f32 %v126, %v210
    %v212 = vpop.f32.mrb[0].mxu0
    %v213 = vpop.f32.mrb[0].mxu0
    %v214 = vpop.f32.mrb[0].mxu0
    %215 = vdwg.mxu0
    %v216 = vmax.f32 %v211, 0.0
    %v217 = vpack.c.bf16 %v216, %v216
    %v218 = vld [vmem:[%s5] sm:$0xf]
    %v219 = vld [vmem:[%s5 + $0x4] sm:$0xf]
    %v220 = vld [vmem:[%s5 + $0x8] sm:$0xf]
    %v221 = vld [vmem:[%s5 + $0xc] sm:$0xf]
    %v222 = vld [vmem:[%s5 + $0x10] sm:$0xf]
    %v223 = vld [vmem:[%s5 + $0x14] sm:$0xf]
    %v224 = vld [vmem:[%s5 + $0x18] sm:$0xf]
    %v225 = vld [vmem:[%s5 + $0x1c] sm:$0xf]
    %v226 = vld [vmem:[%s5 + $0x20] sm:$0xf]
    %v227 = vld [vmem:[%s5 + $0x24] sm:$0xf]
    %v228 = vld [vmem:[%s5 + $0x28] sm:$0xf]
    %v229 = vld [vmem:[%s5 + $0x2c] sm:$0xf]
    %v230 = vld [vmem:[%s5 + $0x30] sm:$0xf]
    %v231 = vld [vmem:[%s5 + $0x34] sm:$0xf]
    %v232 = vld [vmem:[%s5 + $0x38] sm:$0xf]
    %v233 = vld [vmem:[%s5 + $0x3c] sm:$0xf]
    %v234 = vld [vmem:[%s6] sm:$0x1]
    %v236 = vlaneseq
    %v237 = vshrl.u32 %v236, 7
    %v238 = vsub.s32 0, %v237
    %v239 = vrot.slane %v234, %v238
    %v257 = vunpack.c.l.b16 %v218
    %v258 = vunpack.c.l.b16 %v219
    %v259 = vunpack.c.l.b16 %v220
    %v260 = vunpack.c.l.b16 %v221
    %v261 = vunpack.c.l.b16 %v222
    %v262 = vunpack.c.l.b16 %v223
    %v263 = vunpack.c.l.b16 %v224
    %v264 = vunpack.c.l.b16 %v225
    %v265 = vunpack.c.l.b16 %v226
    %v266 = vunpack.c.l.b16 %v227
    %v267 = vunpack.c.l.b16 %v228
    %v268 = vunpack.c.l.b16 %v229
    %v269 = vunpack.c.l.b16 %v230
    %v270 = vunpack.c.l.b16 %v231
    %v271 = vunpack.c.l.b16 %v232
    %v272 = vunpack.c.l.b16 %v233
    %v273 = vpack.c.b16 %v258, %v257
    %v274 = vpack.c.b16 %v260, %v259
    %v275 = vpack.c.b16 %v262, %v261
    %v276 = vpack.c.b16 %v264, %v263
    %v277 = vpack.c.b16 %v266, %v265
    %v278 = vpack.c.b16 %v268, %v267
    %v279 = vpack.c.b16 %v270, %v269
    %v280 = vpack.c.b16 %v272, %v271
    %289 = vmatprep.subr.bf16.mxu0 0
    %290 = vmatpush1.bf16.msra.mxu0 %v273
    %291 = vmatprep.subr.bf16.mxu0 0
    %292 = vmatpush1.bf16.msra.mxu0 %v274
    %293 = vmatprep.subr.bf16.mxu0 0
    %294 = vmatpush1.bf16.msra.mxu0 %v275
    %295 = vmatprep.subr.bf16.mxu0 0
    %296 = vmatpush1.bf16.msra.mxu0 %v276
    %297 = vmatprep.subr.bf16.mxu0 0
    %298 = vmatpush1.bf16.msra.mxu0 %v277
    %299 = vmatprep.subr.bf16.mxu0 0
    %300 = vmatpush1.bf16.msra.mxu0 %v278
    %301 = vmatprep.subr.bf16.mxu0 0
    %302 = vmatpush1.bf16.msra.mxu0 %v279
    %303 = vmatprep.subr.bf16.mxu0 0
    %304 = vmatpush1.bf16.msra.mxu0 %v280
    %305 = vmatprep.subr.bf16.mxu0 0
    %306 = vmatpush1.bf16.msra.mxu0 0
    %307 = vmatprep.subr.bf16.mxu0 0
    %308 = vmatpush1.bf16.msra.mxu0 0
    %309 = vmatprep.subr.bf16.mxu0 0
    %310 = vmatpush1.bf16.msra.mxu0 0
    %311 = vmatprep.subr.bf16.mxu0 0
    %312 = vmatpush1.bf16.msra.mxu0 0
    %313 = vmatprep.subr.bf16.mxu0 0
    %314 = vmatpush1.bf16.msra.mxu0 0
    %315 = vmatprep.subr.bf16.mxu0 0
    %316 = vmatpush1.bf16.msra.mxu0 0
    %317 = vmatprep.subr.bf16.mxu0 0
    %318 = vmatpush1.bf16.msra.mxu0 0
    %319 = vmatprep.subr.bf16.mxu0 0
    %320 = vmatpush1.bf16.msra.mxu0 0
    %321 = vmatprep.mubr.bf16.mxu0 0
    %322 = vmatmul.mubr.bf16.gmra.mrb[0].mxu0 %v217
    %v323 = vpop.f32.mrb[0].mxu0
    %v324 = vadd.f32 %v239, %v323
    %v325 = vpop.f32.mrb[0].mxu0
    %v326 = vpop.f32.mrb[0].mxu0
    %v327 = vpop.f32.mrb[0].mxu0
    %328 = vdwg.mxu0
    %v329 = vlaneseq
    %v330 = vand.u32 %v329, 127
    %v331 = vmax.f32 %v324, -20.0
    %v332 = vmin.f32 %v331, 2.0
    %v333 = vmul.f32 %v332, 1.442695
    %v334 = vpow.pop %v333
    %vm335 = vcmp.ge.s32.totalorder %v330, 8
    %v336 = vsel %vm335, %v334, %v324
    %337 = vst.msk [vmem:[#allocation5] sm:$0xff] %vm59, %v336
    // Predicated region
    $region34: #{tpu_custom_call.1} parent=1 // pred_check
      _
    $region35: #{tpu_custom_call.1} parent=1 // pred_check_branch
      %339 = sbr.rel (0) target = $region37
    $region36: #{tpu_custom_call.1} parent=1 // pred_region
      %s341 = ssub.s32 128, 128
      %342 = vsyncadd [#allocation4], %s341
      %s344 = sshll.u32 [#allocation5], 4
      %s345 = int_to_ptr.vmem [resolvable:$true] %s344
      %347 = dma.vmem_to_hbm [thread:$0]  %s345, 128, %s7, [#allocation4]
    $region37: #{tpu_custom_call.1} parent=1 // pred_fallthru
      _
    // Predicated region
    $region38: #{tpu_custom_call.1} parent=1 // pred_check
      _
    $region39: #{tpu_custom_call.1} parent=1 // pred_check_branch
      %349 = sbr.rel (0) target = $region41
    $region40: #{tpu_custom_call.1} parent=1 // pred_region
      %350 = dma.done [#allocation4], 128
    $region41: #{tpu_custom_call.1} parent=1 // pred_fallthru
      _
    %351 = vsyncpa [#allocation3], 1
    %352 = vsyncpa [#allocation4], 1

</llo_original>
